<compile_context>
chip_gen: v6e
topology: v6e:2x2x1
jax: 0.10.0
libtpu: 0.0.40
codegen_flags: <defaults>
</compile_context>

<pallas_src>
import jax
import jax.numpy as jnp
from jax import lax
from jax.experimental import pallas as pl
from jax.experimental.pallas import tpu as pltpu

IN_DIM, H1_DIM, H2_DIM = 12, 32, 8
DEFAULT_LANE_TILE = 8192          # sweep 4096-16384


def _round_up(x, m):
    return (x + m - 1) // m * m


def _cdiv(a, b):
    return -(-a // b)


# ---------------------------------------------------------------------------
# Kernels
# ---------------------------------------------------------------------------

def _mlp_tail(h1, w2, b2, wh, bh, out_ref):
    """fc2 + ReLU and the fused [means ; log_vars] head; batch on lanes."""
    h2 = jnp.maximum(jnp.dot(w2, h1, preferred_element_type=jnp.float32) + b2, 0.0)
    out_ref[...] = jnp.dot(wh, h2, preferred_element_type=jnp.float32) + bh


def encoder_kernel_native_x(x_ref, w1_ref, b1_ref, w2_ref, b2_ref,
                            wh_ref, bh_ref, out_ref):
    """x tile arrives in native (bt, 12) layout (contiguous HBM reads).

    Layer 1 contracts the feature dim of BOTH operands (NT matmul), so the
    result lands directly in (32, bt) batch-on-lanes form -- no wrapper
    transpose, no extra HBM pass over x.
    """
    h1 = lax.dot_general(
        w1_ref[...], x_ref[...],
        dimension_numbers=(((1,), (1,)), ((), ())),
        preferred_element_type=jnp.float32)                       # (32, bt)
    h1 = jnp.maximum(h1 + b1_ref[...], 0.0)
    _mlp_tail(h1, w2_ref[...], b2_ref[...], wh_ref[...], bh_ref[...], out_ref)


def encoder_kernel_pretransposed_x(x_ref, w1_ref, b1_ref, w2_ref, b2_ref,
                                   wh_ref, bh_ref, out_ref):
    """Fallback: x tile is already (12, bt) (wrapper transpose); NN dots only."""
    h1 = jnp.dot(w1_ref[...], x_ref[...], preferred_element_type=jnp.float32)
    h1 = jnp.maximum(h1 + b1_ref[...], 0.0)
    _mlp_tail(h1, w2_ref[...], b2_ref[...], wh_ref[...], bh_ref[...], out_ref)


# ---------------------------------------------------------------------------
# Parameter canonicalization (one-time, not per call)
# ---------------------------------------------------------------------------

def canonicalize_params(params):
    """Repack PyTorch-convention params for the kernel: weights stay (out, in),
    head weights/biases concatenated (means first), biases become (out, 1)
    columns that broadcast over the lane (batch) axis."""
    wh = jnp.concatenate([params["wm"], params["wv"]], axis=0)            # (2L, 8)
    bh = jnp.concatenate([params["bm"], params["bv"]], axis=0)            # (2L,)
    return dict(
        w1=jnp.asarray(params["w1"], jnp.float32),                        # (32, 12)
        b1=jnp.asarray(params["b1"], jnp.float32)[:, None],               # (32, 1)
        w2=jnp.asarray(params["w2"], jnp.float32),                        # (8, 32)
        b2=jnp.asarray(params["b2"], jnp.float32)[:, None],               # (8, 1)
        wh=jnp.asarray(wh, jnp.float32),                                  # (2L, 8)
        bh=jnp.asarray(bh, jnp.float32)[:, None],                         # (2L, 1)
    )


# ---------------------------------------------------------------------------
# Tiling / call construction
# ---------------------------------------------------------------------------

def _choose_tile(B, lane_tile):
    lane_tile = max(128, _round_up(int(lane_tile), 128))
    bt = min(lane_tile, _round_up(B, 128))
    # v7x / megacore: keep >= 2 grid steps for non-tiny batches so the
    # "parallel" batch axis can shard across both TensorCores.
    if B > 256 and _cdiv(B, bt) < 2:
        bt = min(bt, max(128, _round_up(_cdiv(B, 2), 256)))
    n_tiles = _cdiv(B, bt)
    if n_tiles == 1:
        bt = B              # single full-extent block: exact dims, no padding
    return bt, n_tiles


def _weight_specs(two_l):
    const = lambda i: (0, 0)   # constant index -> DMA'd once, stays resident
    return [
        pl.BlockSpec((H1_DIM, IN_DIM), const),
        pl.BlockSpec((H1_DIM, 1), const),
        pl.BlockSpec((H2_DIM, H1_DIM), const),
        pl.BlockSpec((H2_DIM, 1), const),
        pl.BlockSpec((two_l, H2_DIM), const),
        pl.BlockSpec((two_l, 1), const),
    ]


def _compiler_params(bt, two_l):
    # Pessimistic VMEM estimate (lane-padded, double-buffered x/out tiles plus
    # f32 intermediates).  Only raise the scoped-VMEM limit when the estimate
    # exceeds the smallest default (v5e: 16 MiB); at the default 8192-lane tile
    # this stays ~11 MiB, so no flags are touched.
    est = 4 * bt * (2 * 128                         # x tile x2, lanes pad 12->128
                    + 2 * _round_up(two_l, 8)       # fused output x2
                    + H1_DIM + H2_DIM + 16          # h1 / h2 / layout slack
                    ) + (1 << 20)
    vmem_limit = None
    if est > 12 * 1024 * 1024:
        vmem_limit = min(_round_up(est + est // 2, 1 << 20), 64 * 1024 * 1024)
    return pltpu.CompilerParams(
        dimension_semantics=("parallel",),
        vmem_limit_bytes=vmem_limit,
    )


def _cost_estimate(B, two_l):
    flops = 2 * B * (IN_DIM * H1_DIM + H1_DIM * H2_DIM + H2_DIM * two_l)
    bytes_accessed = 4 * (B * IN_DIM + B * two_l
                          + H1_DIM * IN_DIM + H1_DIM
                          + H2_DIM * H1_DIM + H2_DIM
                          + two_l * H2_DIM + two_l)
    return pl.CostEstimate(flops=flops, transcendentals=0,
                           bytes_accessed=bytes_accessed)


def _call_native(x, cp, bt, n_tiles):
    B = x.shape[0]
    two_l = cp["wh"].shape[0]
    return pl.pallas_call(
        encoder_kernel_native_x,
        out_shape=jax.ShapeDtypeStruct((two_l, B), jnp.float32),
        grid=(n_tiles,),
        in_specs=[pl.BlockSpec((bt, IN_DIM), lambda i: (i, 0))] + _weight_specs(two_l),
        out_specs=pl.BlockSpec((two_l, bt), lambda i: (0, i)),
        compiler_params=_compiler_params(bt, two_l),
        cost_estimate=_cost_estimate(B, two_l),
    )(x, cp["w1"], cp["b1"], cp["w2"], cp["b2"], cp["wh"], cp["bh"])


def _call_pretransposed(x, cp, bt, n_tiles):
    """Previously-validated fallback path: wrapper transpose+pad of x."""
    B = x.shape[0]
    two_l = cp["wh"].shape[0]
    bp = bt * n_tiles
    x_t = jnp.zeros((IN_DIM, bp), jnp.float32).at[:, :B].set(x.T)
    out = pl.pallas_call(
        encoder_kernel_pretransposed_x,
        out_shape=jax.ShapeDtypeStruct((two_l, bp), jnp.float32),
        grid=(n_tiles,),
        in_specs=[pl.BlockSpec((IN_DIM, bt), lambda i: (0, i))] + _weight_specs(two_l),
        out_specs=pl.BlockSpec((two_l, bt), lambda i: (0, i)),
        compiler_params=_compiler_params(bt, two_l),
        cost_estimate=_cost_estimate(B, two_l),
    )(x_t, cp["w1"], cp["b1"], cp["w2"], cp["b2"], cp["wh"], cp["bh"])
    return out[:, :B]


_NATIVE_X_FAILED = False            # latched if this toolchain rejects NT lowering
_VALIDATED_NATIVE_SHAPES = set()    # (B, bt, n_tiles) signatures that ran clean


def _run_encoder(x, cp, bt, n_tiles):
    global _NATIVE_X_FAILED
    sig = (x.shape[0], bt, n_tiles)
    if not _NATIVE_X_FAILED:
        try:
            out = _call_native(x, cp, bt, n_tiles)
            if sig not in _VALIDATED_NATIVE_SHAPES and hasattr(out, "block_until_ready"):
                jax.block_until_ready(out)      # surface lowering errors once per shape
                _VALIDATED_NATIVE_SHAPES.add(sig)
            return out
        except Exception:
            _NATIVE_X_FAILED = True             # fall back permanently
    return _call_pretransposed(x, cp, bt, n_tiles)


# ---------------------------------------------------------------------------
# Public forward passes
# ---------------------------------------------------------------------------

def encoder_forward_lane_dense(x, cparams, *, lane_tile=DEFAULT_LANE_TILE):
    """Returns (means_t, log_vars_t) in the kernel's lane-dense (latent, B)
    layout -- the preferred layout for downstream fusion (e.g. the VAE
    reparameterization), since it skips two full output transposes."""
    x = jnp.asarray(x, jnp.float32)
    B = x.shape[0]
    two_l = cparams["wh"].shape[0]
    latent = two_l // 2
    bt, n_tiles = _choose_tile(B, lane_tile)
    out_t = _run_encoder(x, cparams, bt, n_tiles)     # (2L, B)
    return out_t[:latent], out_t[latent:]


def encoder_forward(x, cparams, *, lane_tile=DEFAULT_LANE_TILE):
    """PyTorch-layout parity wrapper: (means, log_vars), each (B, latent)."""
    means_t, log_vars_t = encoder_forward_lane_dense(x, cparams, lane_tile=lane_tile)
    return means_t.T, log_vars_t.T


# ---------------------------------------------------------------------------
# Init + pure-JAX reference
# ---------------------------------------------------------------------------

def init_params(key, latent_size):
    """Deterministic init matching nn.Linear shapes (uniform +/- 1/sqrt(fan_in))."""
    def linear(key, fan_in, fan_out):
        kw, kb = jax.random.split(key)
        bound = 1.0 / jnp.sqrt(fan_in)
        w = jax.random.uniform(kw, (fan_out, fan_in), jnp.float32, -bound, bound)
        b = jax.random.uniform(kb, (fan_out,), jnp.float32, -bound, bound)
        return w, b

    k1, k2, k3, k4 = jax.random.split(key, 4)
    w1, b1 = linear(k1, IN_DIM, H1_DIM)
    w2, b2 = linear(k2, H1_DIM, H2_DIM)
    wm, bm = linear(k3, H2_DIM, latent_size)
    wv, bv = linear(k4, H2_DIM, latent_size)
    return dict(w1=w1, b1=b1, w2=w2, b2=b2, wm=wm, bm=bm, wv=wv, bv=bv)


def encoder_ref(x, p):
    """Pure-JAX reference (PyTorch semantics) for correctness checking."""
    h1 = jnp.maximum(x @ p["w1"].T + p["b1"], 0.0)
    h2 = jnp.maximum(h1 @ p["w2"].T + p["b2"], 0.0)
    return h2 @ p["wm"].T + p["bm"], h2 @ p["wv"].T + p["bv"]


if __name__ == "__main__":
    key = jax.random.PRNGKey(0)
    k_x, k_p, k_x2 = jax.random.split(key, 3)

    latent_size = 4
    params = init_params(k_p, latent_size)
    cparams = canonicalize_params(params)

    # Small batch: single full-extent block (no padding at all).
    B = 8
    x = jax.random.normal(k_x, (B, IN_DIM), dtype=jnp.float32)
    means, log_vars = encoder_forward(x, cparams)
    jax.block_until_ready((means, log_vars))
    means_ref, log_vars_ref = encoder_ref(x, params)
    assert means.shape == (B, latent_size) and log_vars.shape == (B, latent_size)
    assert jnp.allclose(means, means_ref, atol=1e-5)
    assert jnp.allclose(log_vars, log_vars_ref, atol=1e-5)

    # Larger batch: exercises the multi-tile grid (>= 2 "parallel" steps for
    # v7x's dual TensorCores) and the partial tail block.
    B2 = 1000
    x2 = jax.random.normal(k_x2, (B2, IN_DIM), dtype=jnp.float32)
    m2, lv2 = encoder_forward(x2, cparams)
    jax.block_until_ready((m2, lv2))
    m2_ref, lv2_ref = encoder_ref(x2, params)
    assert jnp.allclose(m2, m2_ref, atol=1e-5)
    assert jnp.allclose(lv2, lv2_ref, atol=1e-5)

    # Lane-dense path consistency (preferred production layout, no transposes).
    mt, lvt = encoder_forward_lane_dense(x2, cparams)
    jax.block_until_ready((mt, lvt))
    assert mt.shape == (latent_size, B2) and lvt.shape == (latent_size, B2)
    assert jnp.allclose(mt.T, m2_ref, atol=1e-5)
    assert jnp.allclose(lvt.T, lv2_ref, atol=1e-5)

    print("KERNEL_OK")
</pallas_src>

<mosaic_0001>
module attributes {stable_mosaic.version = 11 : i64} {
  func.func @encoder_kernel_native_x(%arg0: i32, %arg1: memref<8x12xf32, #tpu.memory_space<vmem>>, %arg2: memref<32x12xf32, #tpu.memory_space<vmem>>, %arg3: memref<32x1xf32, #tpu.memory_space<vmem>>, %arg4: memref<8x32xf32, #tpu.memory_space<vmem>>, %arg5: memref<8x1xf32, #tpu.memory_space<vmem>>, %arg6: memref<8x8xf32, #tpu.memory_space<vmem>>, %arg7: memref<8x1xf32, #tpu.memory_space<vmem>>, %arg8: memref<8x8xf32, #tpu.memory_space<vmem>>) attributes {dimension_semantics = [#tpu.dimension_semantics<parallel>], iteration_bounds = array<i64: 1>, scalar_prefetch = 0 : i64, scratch_operands = 0 : i64, tpu.core_type = #tpu.core_type<tc>, window_params = [{transform_indices = @transform_0, window_bounds = array<i64: 8, 12>}, {pipeline_mode = #tpu.pipeline_mode<synchronous>, transform_indices = @transform_1, window_bounds = array<i64: 32, 12>}, {pipeline_mode = #tpu.pipeline_mode<synchronous>, transform_indices = @transform_2, window_bounds = array<i64: 32, 1>}, {pipeline_mode = #tpu.pipeline_mode<synchronous>, transform_indices = @transform_3, window_bounds = array<i64: 8, 32>}, {pipeline_mode = #tpu.pipeline_mode<synchronous>, transform_indices = @transform_4, window_bounds = array<i64: 8, 1>}, {pipeline_mode = #tpu.pipeline_mode<synchronous>, transform_indices = @transform_5, window_bounds = array<i64: 8, 8>}, {pipeline_mode = #tpu.pipeline_mode<synchronous>, transform_indices = @transform_6, window_bounds = array<i64: 8, 1>}, {transform_indices = @transform_7, window_bounds = array<i64: 8, 8>}]} {
    %c0 = arith.constant 0 : index
    %c0_0 = arith.constant 0 : index
    %0 = vector.load %arg2[%c0, %c0_0] : memref<32x12xf32, #tpu.memory_space<vmem>>, vector<32x12xf32>
    %c0_1 = arith.constant 0 : index
    %c0_2 = arith.constant 0 : index
    %1 = vector.load %arg1[%c0_1, %c0_2] : memref<8x12xf32, #tpu.memory_space<vmem>>, vector<8x12xf32>
    %cst = arith.constant dense<0.000000e+00> : vector<32x8xf32>
    %2 = tpu.matmul %0, %1, %cst {dimension_numbers = #tpu.dot_dimension_numbers<[1], [1], [0], [0], [0, 0, 1, 0], [], []>} : vector<32x12xf32>, vector<8x12xf32>, vector<32x8xf32> -> vector<32x8xf32>
    %c0_3 = arith.constant 0 : index
    %c0_4 = arith.constant 0 : index
    %3 = vector.load %arg3[%c0_3, %c0_4] : memref<32x1xf32, #tpu.memory_space<vmem>>, vector<32x1xf32>
    %4 = vector.broadcast %3 : vector<32x1xf32> to vector<32x8xf32>
    %5 = arith.addf %2, %4 : vector<32x8xf32>
    %cst_5 = arith.constant 0.000000e+00 : f32
    %6 = vector.broadcast %cst_5 : f32 to vector<32x8xf32>
    %7 = arith.maximumf %5, %6 : vector<32x8xf32>
    %c0_6 = arith.constant 0 : index
    %c0_7 = arith.constant 0 : index
    %8 = vector.load %arg4[%c0_6, %c0_7] : memref<8x32xf32, #tpu.memory_space<vmem>>, vector<8x32xf32>
    %c0_8 = arith.constant 0 : index
    %c0_9 = arith.constant 0 : index
    %9 = vector.load %arg5[%c0_8, %c0_9] : memref<8x1xf32, #tpu.memory_space<vmem>>, vector<8x1xf32>
    %c0_10 = arith.constant 0 : index
    %c0_11 = arith.constant 0 : index
    %10 = vector.load %arg6[%c0_10, %c0_11] : memref<8x8xf32, #tpu.memory_space<vmem>>, vector<8x8xf32>
    %c0_12 = arith.constant 0 : index
    %c0_13 = arith.constant 0 : index
    %11 = vector.load %arg7[%c0_12, %c0_13] : memref<8x1xf32, #tpu.memory_space<vmem>>, vector<8x1xf32>
    %cst_14 = arith.constant dense<0.000000e+00> : vector<8x8xf32>
    %12 = tpu.matmul %8, %7, %cst_14 {dimension_numbers = #tpu.dot_dimension_numbers<[1], [0], [0], [1], [0, 0, 1, 1], [], []>} : vector<8x32xf32>, vector<32x8xf32>, vector<8x8xf32> -> vector<8x8xf32>
    %13 = vector.broadcast %9 : vector<8x1xf32> to vector<8x8xf32>
    %14 = arith.addf %12, %13 : vector<8x8xf32>
    %cst_15 = arith.constant 0.000000e+00 : f32
    %15 = vector.broadcast %cst_15 : f32 to vector<8x8xf32>
    %16 = arith.maximumf %14, %15 : vector<8x8xf32>
    %cst_16 = arith.constant dense<0.000000e+00> : vector<8x8xf32>
    %17 = tpu.matmul %10, %16, %cst_16 {dimension_numbers = #tpu.dot_dimension_numbers<[1], [0], [0], [1], [0, 0, 1, 1], [], []>} : vector<8x8xf32>, vector<8x8xf32>, vector<8x8xf32> -> vector<8x8xf32>
    %18 = vector.broadcast %11 : vector<8x1xf32> to vector<8x8xf32>
    %19 = arith.addf %17, %18 : vector<8x8xf32>
    %c0_17 = arith.constant 0 : index
    %c0_18 = arith.constant 0 : index
    %20 = vector.load %arg8[%c0_17, %c0_18] : memref<8x8xf32, #tpu.memory_space<vmem>>, vector<8x8xf32>
    tpu.vector_store %arg8[%c0_17, %c0_18], %19 {strides = array<i32>} : memref<8x8xf32, #tpu.memory_space<vmem>>, vector<8x8xf32>,
    return
  }
  func.func @transform_0(%arg0: i32) -> (i32, i32) {
    %c0_i32 = arith.constant 0 : i32
    %c0_i32_0 = arith.constant 0 : i32
    return %arg0, %c0_i32 : i32, i32
  }
  func.func @transform_1(%arg0: i32) -> (i32, i32) {
    %c0_i32 = arith.constant 0 : i32
    %c0_i32_0 = arith.constant 0 : i32
    %c0_i32_1 = arith.constant 0 : i32
    return %c0_i32, %c0_i32_0 : i32, i32
  }
  func.func @transform_2(%arg0: i32) -> (i32, i32) {
    %c0_i32 = arith.constant 0 : i32
    %c0_i32_0 = arith.constant 0 : i32
    %c0_i32_1 = arith.constant 0 : i32
    return %c0_i32, %c0_i32_0 : i32, i32
  }
  func.func @transform_3(%arg0: i32) -> (i32, i32) {
    %c0_i32 = arith.constant 0 : i32
    %c0_i32_0 = arith.constant 0 : i32
    %c0_i32_1 = arith.constant 0 : i32
    return %c0_i32, %c0_i32_0 : i32, i32
  }
  func.func @transform_4(%arg0: i32) -> (i32, i32) {
    %c0_i32 = arith.constant 0 : i32
    %c0_i32_0 = arith.constant 0 : i32
    %c0_i32_1 = arith.constant 0 : i32
    return %c0_i32, %c0_i32_0 : i32, i32
  }
  func.func @transform_5(%arg0: i32) -> (i32, i32) {
    %c0_i32 = arith.constant 0 : i32
    %c0_i32_0 = arith.constant 0 : i32
    %c0_i32_1 = arith.constant 0 : i32
    return %c0_i32, %c0_i32_0 : i32, i32
  }
  func.func @transform_6(%arg0: i32) -> (i32, i32) {
    %c0_i32 = arith.constant 0 : i32
    %c0_i32_0 = arith.constant 0 : i32
    %c0_i32_1 = arith.constant 0 : i32
    return %c0_i32, %c0_i32_0 : i32, i32
  }
  func.func @transform_7(%arg0: i32) -> (i32, i32) {
    %c0_i32 = arith.constant 0 : i32
    %c0_i32_0 = arith.constant 0 : i32
    return %c0_i32, %arg0 : i32, i32
  }
}

module attributes {stable_mosaic.version = 11 : i64} {
  func.func @encoder_kernel_pretransposed_x(%arg0: i32, %arg1: memref<12x8xf32, #tpu.memory_space<vmem>>, %arg2: memref<32x12xf32, #tpu.memory_space<vmem>>, %arg3: memref<32x1xf32, #tpu.memory_space<vmem>>, %arg4: memref<8x32xf32, #tpu.memory_space<vmem>>, %arg5: memref<8x1xf32, #tpu.memory_space<vmem>>, %arg6: memref<8x8xf32, #tpu.memory_space<vmem>>, %arg7: memref<8x1xf32, #tpu.memory_space<vmem>>, %arg8: memref<8x8xf32, #tpu.memory_space<vmem>>) attributes {dimension_semantics = [#tpu.dimension_semantics<parallel>], iteration_bounds = array<i64: 1>, scalar_prefetch = 0 : i64, scratch_operands = 0 : i64, tpu.core_type = #tpu.core_type<tc>, window_params = [{transform_indices = @transform_0, window_bounds = array<i64: 12, 8>}, {pipeline_mode = #tpu.pipeline_mode<synchronous>, transform_indices = @transform_1, window_bounds = array<i64: 32, 12>}, {pipeline_mode = #tpu.pipeline_mode<synchronous>, transform_indices = @transform_2, window_bounds = array<i64: 32, 1>}, {pipeline_mode = #tpu.pipeline_mode<synchronous>, transform_indices = @transform_3, window_bounds = array<i64: 8, 32>}, {pipeline_mode = #tpu.pipeline_mode<synchronous>, transform_indices = @transform_4, window_bounds = array<i64: 8, 1>}, {pipeline_mode = #tpu.pipeline_mode<synchronous>, transform_indices = @transform_5, window_bounds = array<i64: 8, 8>}, {pipeline_mode = #tpu.pipeline_mode<synchronous>, transform_indices = @transform_6, window_bounds = array<i64: 8, 1>}, {transform_indices = @transform_7, window_bounds = array<i64: 8, 8>}]} {
    %c0 = arith.constant 0 : index
    %c0_0 = arith.constant 0 : index
    %0 = vector.load %arg2[%c0, %c0_0] : memref<32x12xf32, #tpu.memory_space<vmem>>, vector<32x12xf32>
    %c0_1 = arith.constant 0 : index
    %c0_2 = arith.constant 0 : index
    %1 = vector.load %arg1[%c0_1, %c0_2] : memref<12x8xf32, #tpu.memory_space<vmem>>, vector<12x8xf32>
    %cst = arith.constant dense<0.000000e+00> : vector<32x8xf32>
    %2 = tpu.matmul %0, %1, %cst {dimension_numbers = #tpu.dot_dimension_numbers<[1], [0], [0], [1], [0, 0, 1, 1], [], []>} : vector<32x12xf32>, vector<12x8xf32>, vector<32x8xf32> -> vector<32x8xf32>
    %c0_3 = arith.constant 0 : index
    %c0_4 = arith.constant 0 : index
    %3 = vector.load %arg3[%c0_3, %c0_4] : memref<32x1xf32, #tpu.memory_space<vmem>>, vector<32x1xf32>
    %4 = vector.broadcast %3 : vector<32x1xf32> to vector<32x8xf32>
    %5 = arith.addf %2, %4 : vector<32x8xf32>
    %cst_5 = arith.constant 0.000000e+00 : f32
    %6 = vector.broadcast %cst_5 : f32 to vector<32x8xf32>
    %7 = arith.maximumf %5, %6 : vector<32x8xf32>
    %c0_6 = arith.constant 0 : index
    %c0_7 = arith.constant 0 : index
    %8 = vector.load %arg4[%c0_6, %c0_7] : memref<8x32xf32, #tpu.memory_space<vmem>>, vector<8x32xf32>
    %c0_8 = arith.constant 0 : index
    %c0_9 = arith.constant 0 : index
    %9 = vector.load %arg5[%c0_8, %c0_9] : memref<8x1xf32, #tpu.memory_space<vmem>>, vector<8x1xf32>
    %c0_10 = arith.constant 0 : index
    %c0_11 = arith.constant 0 : index
    %10 = vector.load %arg6[%c0_10, %c0_11] : memref<8x8xf32, #tpu.memory_space<vmem>>, vector<8x8xf32>
    %c0_12 = arith.constant 0 : index
    %c0_13 = arith.constant 0 : index
    %11 = vector.load %arg7[%c0_12, %c0_13] : memref<8x1xf32, #tpu.memory_space<vmem>>, vector<8x1xf32>
    %cst_14 = arith.constant dense<0.000000e+00> : vector<8x8xf32>
    %12 = tpu.matmul %8, %7, %cst_14 {dimension_numbers = #tpu.dot_dimension_numbers<[1], [0], [0], [1], [0, 0, 1, 1], [], []>} : vector<8x32xf32>, vector<32x8xf32>, vector<8x8xf32> -> vector<8x8xf32>
    %13 = vector.broadcast %9 : vector<8x1xf32> to vector<8x8xf32>
    %14 = arith.addf %12, %13 : vector<8x8xf32>
    %cst_15 = arith.constant 0.000000e+00 : f32
    %15 = vector.broadcast %cst_15 : f32 to vector<8x8xf32>
    %16 = arith.maximumf %14, %15 : vector<8x8xf32>
    %cst_16 = arith.constant dense<0.000000e+00> : vector<8x8xf32>
    %17 = tpu.matmul %10, %16, %cst_16 {dimension_numbers = #tpu.dot_dimension_numbers<[1], [0], [0], [1], [0, 0, 1, 1], [], []>} : vector<8x8xf32>, vector<8x8xf32>, vector<8x8xf32> -> vector<8x8xf32>
    %18 = vector.broadcast %11 : vector<8x1xf32> to vector<8x8xf32>
    %19 = arith.addf %17, %18 : vector<8x8xf32>
    %c0_17 = arith.constant 0 : index
    %c0_18 = arith.constant 0 : index
    %20 = vector.load %arg8[%c0_17, %c0_18] : memref<8x8xf32, #tpu.memory_space<vmem>>, vector<8x8xf32>
    tpu.vector_store %arg8[%c0_17, %c0_18], %19 {strides = array<i32>} : memref<8x8xf32, #tpu.memory_space<vmem>>, vector<8x8xf32>,
    return
  }
  func.func @transform_0(%arg0: i32) -> (i32, i32) {
    %c0_i32 = arith.constant 0 : i32
    %c0_i32_0 = arith.constant 0 : i32
    return %c0_i32, %arg0 : i32, i32
  }
  func.func @transform_1(%arg0: i32) -> (i32, i32) {
    %c0_i32 = arith.constant 0 : i32
    %c0_i32_0 = arith.constant 0 : i32
    %c0_i32_1 = arith.constant 0 : i32
    return %c0_i32, %c0_i32_0 : i32, i32
  }
  func.func @transform_2(%arg0: i32) -> (i32, i32) {
    %c0_i32 = arith.constant 0 : i32
    %c0_i32_0 = arith.constant 0 : i32
    %c0_i32_1 = arith.constant 0 : i32
    return %c0_i32, %c0_i32_0 : i32, i32
  }
  func.func @transform_3(%arg0: i32) -> (i32, i32) {
    %c0_i32 = arith.constant 0 : i32
    %c0_i32_0 = arith.constant 0 : i32
    %c0_i32_1 = arith.constant 0 : i32
    return %c0_i32, %c0_i32_0 : i32, i32
  }
  func.func @transform_4(%arg0: i32) -> (i32, i32) {
    %c0_i32 = arith.constant 0 : i32
    %c0_i32_0 = arith.constant 0 : i32
    %c0_i32_1 = arith.constant 0 : i32
    return %c0_i32, %c0_i32_0 : i32, i32
  }
  func.func @transform_5(%arg0: i32) -> (i32, i32) {
    %c0_i32 = arith.constant 0 : i32
    %c0_i32_0 = arith.constant 0 : i32
    %c0_i32_1 = arith.constant 0 : i32
    return %c0_i32, %c0_i32_0 : i32, i32
  }
  func.func @transform_6(%arg0: i32) -> (i32, i32) {
    %c0_i32 = arith.constant 0 : i32
    %c0_i32_0 = arith.constant 0 : i32
    %c0_i32_1 = arith.constant 0 : i32
    return %c0_i32, %c0_i32_0 : i32, i32
  }
  func.func @transform_7(%arg0: i32) -> (i32, i32) {
    %c0_i32 = arith.constant 0 : i32
    %c0_i32_0 = arith.constant 0 : i32
    return %c0_i32, %arg0 : i32, i32
  }
}

</mosaic_0001>

<llo_original>
// kernel: tpu_custom_call.1
$region0: #{tpu_custom_call.1}
  #allocation0 [shape = 'u32[]', space=smem, size = 0x4, offset = 0x4, fixed_abs, tag = 'smem constant byte address 0x4 - core index']
  #allocation1 [shape = 'u32[144,128]{1,0:T(1,128)}', space=vmem, size = 0x12000, scoped, tag = 'internal scratch']
  %s0 = inlined_call_operand.vmem [shape: f32[8,12], index: 0, kind: input, shape index: {}]
  %s1 = inlined_call_operand.vmem [shape: f32[32,12], index: 1, kind: input, shape index: {}]
  %s2 = inlined_call_operand.vmem [shape: f32[32,1], index: 2, kind: input, shape index: {}]
  %s3 = inlined_call_operand.vmem [shape: f32[8,32], index: 3, kind: input, shape index: {}]
  %s4 = inlined_call_operand.vmem [shape: f32[8,1], index: 4, kind: input, shape index: {}]
  %s5 = inlined_call_operand.vmem [shape: f32[8,8], index: 5, kind: input, shape index: {}]
  %s6 = inlined_call_operand.vmem [shape: f32[8,1], index: 6, kind: input, shape index: {}]
  %s7 = inlined_call_operand.hbm [shape: f32[8,8], index: 7, kind: output, shape index: {}]
  %s8 = sld [smem:[#allocation0]]
  $region38: #{tpu_custom_call.1} parent=0
    _
  %s10 = ssub.s32 1, %s8
  %s11 = scalar_select 0, %s10, %s8
  $region1: #{tpu_custom_call.1} parent=0
    #allocation2 [shape = 'u8[4096]{0}', space=vmem, size = 0x1000, scoped, tag = 'output window, operand 0, single buffered']
    #allocation3 [shape = 's32[1]{0}', space=sflag, size = 0x4, scoped, tag = 'scoped memory for tpu_custom_call.1']
    %12 = vsyncpa [#allocation3], 0
    // Predicated region
    $region2: #{tpu_custom_call.1} parent=1 // pred_check
      _
    $region3: #{tpu_custom_call.1} parent=1 // pred_check_branch
      %14 = sbr.rel (0) target = $region5
    $region4: #{tpu_custom_call.1} parent=1 // pred_region
      _
    $region5: #{tpu_custom_call.1} parent=1 // pred_fallthru
      _
    // Predicated region
    $region6: #{tpu_custom_call.1} parent=1 // pred_check
      _
    $region7: #{tpu_custom_call.1} parent=1 // pred_check_branch
      %16 = sbr.rel (0) target = $region9
    $region8: #{tpu_custom_call.1} parent=1 // pred_region
      _
    $region9: #{tpu_custom_call.1} parent=1 // pred_fallthru
      _
    // Predicated region
    $region10: #{tpu_custom_call.1} parent=1 // pred_check
      _
    $region11: #{tpu_custom_call.1} parent=1 // pred_check_branch
      %18 = sbr.rel (0) target = $region13
    $region12: #{tpu_custom_call.1} parent=1 // pred_region
      _
    $region13: #{tpu_custom_call.1} parent=1 // pred_fallthru
      _
    // Predicated region
    $region14: #{tpu_custom_call.1} parent=1 // pred_check
      _
    $region15: #{tpu_custom_call.1} parent=1 // pred_check_branch
      %20 = sbr.rel (0) target = $region17
    $region16: #{tpu_custom_call.1} parent=1 // pred_region
      _
    $region17: #{tpu_custom_call.1} parent=1 // pred_fallthru
      _
    // Predicated region
    $region18: #{tpu_custom_call.1} parent=1 // pred_check
      _
    $region19: #{tpu_custom_call.1} parent=1 // pred_check_branch
      %22 = sbr.rel (0) target = $region21
    $region20: #{tpu_custom_call.1} parent=1 // pred_region
      _
    $region21: #{tpu_custom_call.1} parent=1 // pred_fallthru
      _
    // Predicated region
    $region22: #{tpu_custom_call.1} parent=1 // pred_check
      _
    $region23: #{tpu_custom_call.1} parent=1 // pred_check_branch
      %24 = sbr.rel (0) target = $region25
    $region24: #{tpu_custom_call.1} parent=1 // pred_region
      _
    $region25: #{tpu_custom_call.1} parent=1 // pred_fallthru
      _
    // Predicated region
    $region26: #{tpu_custom_call.1} parent=1 // pred_check
      _
    $region27: #{tpu_custom_call.1} parent=1 // pred_check_branch
      %26 = sbr.rel (0) target = $region29
    $region28: #{tpu_custom_call.1} parent=1 // pred_region
      _
    $region29: #{tpu_custom_call.1} parent=1 // pred_fallthru
      _
    %v27 = vld [vmem:[%s1] sm:$0xff]
    %v28 = vld [vmem:[%s1 + $0x8] sm:$0xff]
    %v29 = vld [vmem:[%s1 + $0x10] sm:$0xff]
    %v30 = vld [vmem:[%s1 + $0x18] sm:$0xff]
    %v31 = vld [vmem:[%s0] sm:$0xff]
    %v32 = vld [vmem:[%s2] sm:$0xff]
    %v33 = vld [vmem:[%s2 + $0x8] sm:$0xff]
    %v34 = vld [vmem:[%s2 + $0x10] sm:$0xff]
    %v35 = vld [vmem:[%s2 + $0x18] sm:$0xff]
    %37 = vset.pattern.permute.xlu0 0
    %38 = vperm.xlu0 %37, %v32
    %v39 = vpop.permute.xlu0 %38
    %42 = vset.pattern.permute.xlu0 0
    %43 = vperm.xlu0 %42, %v33
    %v44 = vpop.permute.xlu0 %43
    %47 = vset.pattern.permute.xlu0 0
    %48 = vperm.xlu0 %47, %v34
    %v49 = vpop.permute.xlu0 %48
    %52 = vset.pattern.permute.xlu0 0
    %53 = vperm.xlu0 %52, %v35
    %v54 = vpop.permute.xlu0 %53
    %vm56 = vcmask 97280
    %v58 = vsel %vm56, %v27, 0
    %v61 = vsel %vm56, %v28, 0
    %v64 = vsel %vm56, %v29, 0
    %v67 = vsel %vm56, %v30, 0
    %v70 = vsel %vm56, %v31, 0
    %72 = vmatprep.subr.mxu0 0.0
    %73 = vmatpush1.xpose.msra.mxu0 0.0
    %74 = vmatprep.subr.mxu0 0.0
    %75 = vmatpush1.xpose.msra.mxu0 0.0
    %76 = vmatprep.subr.mxu0 0.0
    %77 = vmatpush1.xpose.msra.mxu0 0.0
    %78 = vmatprep.subr.mxu0 0.0
    %79 = vmatpush1.xpose.msra.mxu0 0.0
    %80 = vmatprep.subr.mxu0 0.0
    %81 = vmatpush1.xpose.msra.mxu0 0.0
    %82 = vmatprep.subr.mxu0 0.0
    %83 = vmatpush1.xpose.msra.mxu0 0.0
    %84 = vmatprep.subr.mxu0 0.0
    %85 = vmatpush1.xpose.msra.mxu0 0.0
    %86 = vmatprep.subr.mxu0 0.0
    %87 = vmatpush1.xpose.msra.mxu0 0.0
    %88 = vmatprep.subr.mxu0 0.0
    %89 = vmatpush1.xpose.msra.mxu0 0.0
    %90 = vmatprep.subr.mxu0 0.0
    %91 = vmatpush1.xpose.msra.mxu0 0.0
    %92 = vmatprep.subr.mxu0 0.0
    %93 = vmatpush1.xpose.msra.mxu0 0.0
    %94 = vmatprep.subr.mxu0 0.0
    %95 = vmatpush1.xpose.msra.mxu0 0.0
    %96 = vmatprep.subr.mxu0 0.0
    %97 = vmatpush1.xpose.msra.mxu0 0.0
    %98 = vmatprep.subr.mxu0 0.0
    %99 = vmatpush1.xpose.msra.mxu0 0.0
    %100 = vmatprep.subr.mxu0 0.0
    %101 = vmatpush1.xpose.msra.mxu0 0.0
    %102 = vmatprep.subr.mxu0 0.0
    %103 = vmatpush1.xpose.msra.mxu0 %v70
    %104 = vmatprep.subr.mxu0 0.0
    %105 = vmatpush2.xpose.msra.mxu0 0.0
    %106 = vmatprep.subr.mxu0 0.0
    %107 = vmatpush2.xpose.msra.mxu0 0.0
    %108 = vmatprep.subr.mxu0 0.0
    %109 = vmatpush2.xpose.msra.mxu0 0.0
    %110 = vmatprep.subr.mxu0 0.0
    %111 = vmatpush2.xpose.msra.mxu0 0.0
    %112 = vmatprep.subr.mxu0 0.0
    %113 = vmatpush2.xpose.msra.mxu0 0.0
    %114 = vmatprep.subr.mxu0 0.0
    %115 = vmatpush2.xpose.msra.mxu0 0.0
    %116 = vmatprep.subr.mxu0 0.0
    %117 = vmatpush2.xpose.msra.mxu0 0.0
    %118 = vmatprep.subr.mxu0 0.0
    %119 = vmatpush2.xpose.msra.mxu0 0.0
    %120 = vmatprep.subr.mxu0 0.0
    %121 = vmatpush2.xpose.msra.mxu0 0.0
    %122 = vmatprep.subr.mxu0 0.0
    %123 = vmatpush2.xpose.msra.mxu0 0.0
    %124 = vmatprep.subr.mxu0 0.0
    %125 = vmatpush2.xpose.msra.mxu0 0.0
    %126 = vmatprep.subr.mxu0 0.0
    %127 = vmatpush2.xpose.msra.mxu0 0.0
    %128 = vmatprep.subr.mxu0 0.0
    %129 = vmatpush2.xpose.msra.mxu0 0.0
    %130 = vmatprep.subr.mxu0 0.0
    %131 = vmatpush2.xpose.msra.mxu0 0.0
    %132 = vmatprep.subr.mxu0 0.0
    %133 = vmatpush2.xpose.msra.mxu0 0.0
    %134 = vmatprep.subr.mxu0 0.0
    %135 = vmatpush2.xpose.msra.mxu0 0.0
    %136 = vmatprep.mubr.f32.mxu0 0.0
    %137 = vmatmul.mubr.f32.gmra.mxu0 %v58
    %v138 = vpop.f32.mrf.mxu0
    %v139 = vadd.f32 %v39, %v138
    %v140 = vpop.f32.mrf.mxu0
    %141 = vmatprep.mubr.f32.mxu0 0.0
    %142 = vmatmul.mubr.f32.gmra.mxu0 %v61
    %v143 = vpop.f32.mrf.mxu0
    %v144 = vadd.f32 %v44, %v143
    %v145 = vpop.f32.mrf.mxu0
    %146 = vmatprep.mubr.f32.mxu0 0.0
    %147 = vmatmul.mubr.f32.gmra.mxu0 %v64
    %v148 = vpop.f32.mrf.mxu0
    %v149 = vadd.f32 %v49, %v148
    %v150 = vpop.f32.mrf.mxu0
    %151 = vmatprep.mubr.f32.mxu0 0.0
    %152 = vmatmul.mubr.f32.gmra.mxu0 %v67
    %v153 = vpop.f32.mrf.mxu0
    %v154 = vadd.f32 %v54, %v153
    %v155 = vpop.f32.mrf.mxu0
    %156 = vdwg.mxu0
    %v157 = vmax.f32 %v139, 0.0
    %v158 = vmax.f32 %v144, 0.0
    %v159 = vmax.f32 %v149, 0.0
    %v160 = vmax.f32 %v154, 0.0
    %v161 = vld [vmem:[%s3] sm:$0xff]
    %v162 = vld [vmem:[%s4] sm:$0xff]
    %v163 = vld [vmem:[%s5] sm:$0xff]
    %v164 = vld [vmem:[%s6] sm:$0xff]
    %166 = vset.pattern.permute.xlu0 0
    %167 = vperm.xlu0 %166, %v162
    %v168 = vpop.permute.xlu0 %167
    %vm170 = vcmask 261120
    %v172 = vsel %vm170, %v161, 0
    %174 = vmatprep.subr.mxu0 0.0
    %175 = vmatpush1.msra.mxu0 0.0
    %176 = vmatprep.subr.mxu0 0.0
    %177 = vmatpush1.msra.mxu0 0.0
    %178 = vmatprep.subr.mxu0 0.0
    %179 = vmatpush1.msra.mxu0 0.0
    %180 = vmatprep.subr.mxu0 0.0
    %181 = vmatpush1.msra.mxu0 0.0
    %182 = vmatprep.subr.mxu0 0.0
    %183 = vmatpush1.msra.mxu0 0.0
    %184 = vmatprep.subr.mxu0 0.0
    %185 = vmatpush1.msra.mxu0 0.0
    %186 = vmatprep.subr.mxu0 0.0
    %187 = vmatpush1.msra.mxu0 0.0
    %188 = vmatprep.subr.mxu0 0.0
    %189 = vmatpush1.msra.mxu0 0.0
    %190 = vmatprep.subr.mxu0 0.0
    %191 = vmatpush1.msra.mxu0 0.0
    %192 = vmatprep.subr.mxu0 0.0
    %193 = vmatpush1.msra.mxu0 0.0
    %194 = vmatprep.subr.mxu0 0.0
    %195 = vmatpush1.msra.mxu0 0.0
    %196 = vmatprep.subr.mxu0 0.0
    %197 = vmatpush1.msra.mxu0 0.0
    %198 = vmatprep.subr.mxu0 0.0
    %199 = vmatpush1.msra.mxu0 %v160
    %200 = vmatprep.subr.mxu0 0.0
    %201 = vmatpush1.msra.mxu0 %v159
    %202 = vmatprep.subr.mxu0 0.0
    %203 = vmatpush1.msra.mxu0 %v158
    %204 = vmatprep.subr.mxu0 0.0
    %205 = vmatpush1.msra.mxu0 %v157
    %206 = vmatprep.subr.mxu0 0.0
    %207 = vmatpush2.msra.mxu0 0.0
    %208 = vmatprep.subr.mxu0 0.0
    %209 = vmatpush2.msra.mxu0 0.0
    %210 = vmatprep.subr.mxu0 0.0
    %211 = vmatpush2.msra.mxu0 0.0
    %212 = vmatprep.subr.mxu0 0.0
    %213 = vmatpush2.msra.mxu0 0.0
    %214 = vmatprep.subr.mxu0 0.0
    %215 = vmatpush2.msra.mxu0 0.0
    %216 = vmatprep.subr.mxu0 0.0
    %217 = vmatpush2.msra.mxu0 0.0
    %218 = vmatprep.subr.mxu0 0.0
    %219 = vmatpush2.msra.mxu0 0.0
    %220 = vmatprep.subr.mxu0 0.0
    %221 = vmatpush2.msra.mxu0 0.0
    %222 = vmatprep.subr.mxu0 0.0
    %223 = vmatpush2.msra.mxu0 0.0
    %224 = vmatprep.subr.mxu0 0.0
    %225 = vmatpush2.msra.mxu0 0.0
    %226 = vmatprep.subr.mxu0 0.0
    %227 = vmatpush2.msra.mxu0 0.0
    %228 = vmatprep.subr.mxu0 0.0
    %229 = vmatpush2.msra.mxu0 0.0
    %230 = vmatprep.subr.mxu0 0.0
    %231 = vmatpush2.msra.mxu0 0.0
    %232 = vmatprep.subr.mxu0 0.0
    %233 = vmatpush2.msra.mxu0 0.0
    %234 = vmatprep.subr.mxu0 0.0
    %235 = vmatpush2.msra.mxu0 0.0
    %236 = vmatprep.subr.mxu0 0.0
    %237 = vmatpush2.msra.mxu0 0.0
    %238 = vmatprep.mubr.f32.mxu0 0.0
    %239 = vmatmul.mubr.f32.gmra.mxu0 %v172
    %v240 = vpop.f32.mrf.mxu0
    %v241 = vadd.f32 %v168, %v240
    %v242 = vpop.f32.mrf.mxu0
    %243 = vdwg.mxu0
    %v244 = vmax.f32 %v241, 0.0
    %246 = vset.pattern.permute.xlu0 0
    %247 = vperm.xlu0 %246, %v164
    %v248 = vpop.permute.xlu0 %247
    %vm250 = vcmask 64512
    %v252 = vsel %vm250, %v163, 0
    %254 = vmatprep.subr.mxu0 0.0
    %255 = vmatpush1.msra.mxu0 0.0
    %256 = vmatprep.subr.mxu0 0.0
    %257 = vmatpush1.msra.mxu0 0.0
    %258 = vmatprep.subr.mxu0 0.0
    %259 = vmatpush1.msra.mxu0 0.0
    %260 = vmatprep.subr.mxu0 0.0
    %261 = vmatpush1.msra.mxu0 0.0
    %262 = vmatprep.subr.mxu0 0.0
    %263 = vmatpush1.msra.mxu0 0.0
    %264 = vmatprep.subr.mxu0 0.0
    %265 = vmatpush1.msra.mxu0 0.0
    %266 = vmatprep.subr.mxu0 0.0
    %267 = vmatpush1.msra.mxu0 0.0
    %268 = vmatprep.subr.mxu0 0.0
    %269 = vmatpush1.msra.mxu0 0.0
    %270 = vmatprep.subr.mxu0 0.0
    %271 = vmatpush1.msra.mxu0 0.0
    %272 = vmatprep.subr.mxu0 0.0
    %273 = vmatpush1.msra.mxu0 0.0
    %274 = vmatprep.subr.mxu0 0.0
    %275 = vmatpush1.msra.mxu0 0.0
    %276 = vmatprep.subr.mxu0 0.0
    %277 = vmatpush1.msra.mxu0 0.0
    %278 = vmatprep.subr.mxu0 0.0
    %279 = vmatpush1.msra.mxu0 0.0
    %280 = vmatprep.subr.mxu0 0.0
    %281 = vmatpush1.msra.mxu0 0.0
    %282 = vmatprep.subr.mxu0 0.0
    %283 = vmatpush1.msra.mxu0 0.0
    %284 = vmatprep.subr.mxu0 0.0
    %285 = vmatpush1.msra.mxu0 %v244
    %286 = vmatprep.subr.mxu0 0.0
    %287 = vmatpush2.msra.mxu0 0.0
    %288 = vmatprep.subr.mxu0 0.0
    %289 = vmatpush2.msra.mxu0 0.0
    %290 = vmatprep.subr.mxu0 0.0
    %291 = vmatpush2.msra.mxu0 0.0
    %292 = vmatprep.subr.mxu0 0.0
    %293 = vmatpush2.msra.mxu0 0.0
    %294 = vmatprep.subr.mxu0 0.0
    %295 = vmatpush2.msra.mxu0 0.0
    %296 = vmatprep.subr.mxu0 0.0
    %297 = vmatpush2.msra.mxu0 0.0
    %298 = vmatprep.subr.mxu0 0.0
    %299 = vmatpush2.msra.mxu0 0.0
    %300 = vmatprep.subr.mxu0 0.0
    %301 = vmatpush2.msra.mxu0 0.0
    %302 = vmatprep.subr.mxu0 0.0
    %303 = vmatpush2.msra.mxu0 0.0
    %304 = vmatprep.subr.mxu0 0.0
    %305 = vmatpush2.msra.mxu0 0.0
    %306 = vmatprep.subr.mxu0 0.0
    %307 = vmatpush2.msra.mxu0 0.0
    %308 = vmatprep.subr.mxu0 0.0
    %309 = vmatpush2.msra.mxu0 0.0
    %310 = vmatprep.subr.mxu0 0.0
    %311 = vmatpush2.msra.mxu0 0.0
    %312 = vmatprep.subr.mxu0 0.0
    %313 = vmatpush2.msra.mxu0 0.0
    %314 = vmatprep.subr.mxu0 0.0
    %315 = vmatpush2.msra.mxu0 0.0
    %316 = vmatprep.subr.mxu0 0.0
    %317 = vmatpush2.msra.mxu0 0.0
    %318 = vmatprep.mubr.f32.mxu0 0.0
    %319 = vmatmul.mubr.f32.gmra.mxu0 %v252
    %v320 = vpop.f32.mrf.mxu0
    %v321 = vadd.f32 %v248, %v320
    %v322 = vpop.f32.mrf.mxu0
    %323 = vdwg.mxu0
    %324 = vst.msk [vmem:[#allocation2] sm:$0xff] %vm250, %v321
    // Predicated region
    $region30: #{tpu_custom_call.1} parent=1 // pred_check
      _
    $region31: #{tpu_custom_call.1} parent=1 // pred_check_branch
      %326 = sbr.rel (0) target = $region33
    $region32: #{tpu_custom_call.1} parent=1 // pred_region
      %s328 = ssub.s32 128, 128
      %329 = vsyncadd [#allocation3], %s328
      %s331 = sshll.u32 [#allocation2], 4
      %s332 = int_to_ptr.vmem [resolvable:$true] %s331
      %334 = dma.vmem_to_hbm [thread:$0]  %s332, 128, %s7, [#allocation3]
    $region33: #{tpu_custom_call.1} parent=1 // pred_fallthru
      _
    // Predicated region
    $region34: #{tpu_custom_call.1} parent=1 // pred_check
      _
    $region35: #{tpu_custom_call.1} parent=1 // pred_check_branch
      %336 = sbr.rel (0) target = $region37
    $region36: #{tpu_custom_call.1} parent=1 // pred_region
      %337 = dma.done [#allocation3], 128
    $region37: #{tpu_custom_call.1} parent=1 // pred_fallthru
      _
    %338 = vsyncpa [#allocation3], 1

// kernel: tpu_custom_call.1
$region0: #{tpu_custom_call.1}
  #allocation0 [shape = 'u32[]', space=smem, size = 0x4, offset = 0x4, fixed_abs, tag = 'smem constant byte address 0x4 - core index']
  #allocation1 [shape = 'u32[144,128]{1,0:T(1,128)}', space=vmem, size = 0x12000, scoped, tag = 'internal scratch']
  %s0 = inlined_call_operand.vmem [shape: f32[12,8], index: 0, kind: input, shape index: {}]
  %s1 = inlined_call_operand.vmem [shape: f32[32,12], index: 1, kind: input, shape index: {}]
  %s2 = inlined_call_operand.vmem [shape: f32[32,1], index: 2, kind: input, shape index: {}]
  %s3 = inlined_call_operand.vmem [shape: f32[8,32], index: 3, kind: input, shape index: {}]
  %s4 = inlined_call_operand.vmem [shape: f32[8,1], index: 4, kind: input, shape index: {}]
  %s5 = inlined_call_operand.vmem [shape: f32[8,8], index: 5, kind: input, shape index: {}]
  %s6 = inlined_call_operand.vmem [shape: f32[8,1], index: 6, kind: input, shape index: {}]
  %s7 = inlined_call_operand.hbm [shape: f32[8,8], index: 7, kind: output, shape index: {}]
  %s8 = sld [smem:[#allocation0]]
  $region38: #{tpu_custom_call.1} parent=0
    _
  %s10 = ssub.s32 1, %s8
  %s11 = scalar_select 0, %s10, %s8
  $region1: #{tpu_custom_call.1} parent=0
    #allocation2 [shape = 'u8[4096]{0}', space=vmem, size = 0x1000, scoped, tag = 'output window, operand 0, single buffered']
    #allocation3 [shape = 's32[1]{0}', space=sflag, size = 0x4, scoped, tag = 'scoped memory for tpu_custom_call.1']
    %12 = vsyncpa [#allocation3], 0
    // Predicated region
    $region2: #{tpu_custom_call.1} parent=1 // pred_check
      _
    $region3: #{tpu_custom_call.1} parent=1 // pred_check_branch
      %14 = sbr.rel (0) target = $region5
    $region4: #{tpu_custom_call.1} parent=1 // pred_region
      _
    $region5: #{tpu_custom_call.1} parent=1 // pred_fallthru
      _
    // Predicated region
    $region6: #{tpu_custom_call.1} parent=1 // pred_check
      _
    $region7: #{tpu_custom_call.1} parent=1 // pred_check_branch
      %16 = sbr.rel (0) target = $region9
    $region8: #{tpu_custom_call.1} parent=1 // pred_region
      _
    $region9: #{tpu_custom_call.1} parent=1 // pred_fallthru
      _
    // Predicated region
    $region10: #{tpu_custom_call.1} parent=1 // pred_check
      _
    $region11: #{tpu_custom_call.1} parent=1 // pred_check_branch
      %18 = sbr.rel (0) target = $region13
    $region12: #{tpu_custom_call.1} parent=1 // pred_region
      _
    $region13: #{tpu_custom_call.1} parent=1 // pred_fallthru
      _
    // Predicated region
    $region14: #{tpu_custom_call.1} parent=1 // pred_check
      _
    $region15: #{tpu_custom_call.1} parent=1 // pred_check_branch
      %20 = sbr.rel (0) target = $region17
    $region16: #{tpu_custom_call.1} parent=1 // pred_region
      _
    $region17: #{tpu_custom_call.1} parent=1 // pred_fallthru
      _
    // Predicated region
    $region18: #{tpu_custom_call.1} parent=1 // pred_check
      _
    $region19: #{tpu_custom_call.1} parent=1 // pred_check_branch
      %22 = sbr.rel (0) target = $region21
    $region20: #{tpu_custom_call.1} parent=1 // pred_region
      _
    $region21: #{tpu_custom_call.1} parent=1 // pred_fallthru
      _
    // Predicated region
    $region22: #{tpu_custom_call.1} parent=1 // pred_check
      _
    $region23: #{tpu_custom_call.1} parent=1 // pred_check_branch
      %24 = sbr.rel (0) target = $region25
    $region24: #{tpu_custom_call.1} parent=1 // pred_region
      _
    $region25: #{tpu_custom_call.1} parent=1 // pred_fallthru
      _
    // Predicated region
    $region26: #{tpu_custom_call.1} parent=1 // pred_check
      _
    $region27: #{tpu_custom_call.1} parent=1 // pred_check_branch
      %26 = sbr.rel (0) target = $region29
    $region28: #{tpu_custom_call.1} parent=1 // pred_region
      _
    $region29: #{tpu_custom_call.1} parent=1 // pred_fallthru
      _
    %v27 = vld [vmem:[%s1] sm:$0xff]
    %v28 = vld [vmem:[%s1 + $0x8] sm:$0xff]
    %v29 = vld [vmem:[%s1 + $0x10] sm:$0xff]
    %v30 = vld [vmem:[%s1 + $0x18] sm:$0xff]
    %v31 = vld [vmem:[%s0] sm:$0xff]
    %v32 = vld [vmem:[%s0 + $0x8] sm:$0xf]
    %v33 = vld [vmem:[%s2] sm:$0xff]
    %v34 = vld [vmem:[%s2 + $0x8] sm:$0xff]
    %v35 = vld [vmem:[%s2 + $0x10] sm:$0xff]
    %v36 = vld [vmem:[%s2 + $0x18] sm:$0xff]
    %38 = vset.pattern.permute.xlu0 0
    %39 = vperm.xlu0 %38, %v33
    %v40 = vpop.permute.xlu0 %39
    %43 = vset.pattern.permute.xlu0 0
    %44 = vperm.xlu0 %43, %v34
    %v45 = vpop.permute.xlu0 %44
    %48 = vset.pattern.permute.xlu0 0
    %49 = vperm.xlu0 %48, %v35
    %v50 = vpop.permute.xlu0 %49
    %53 = vset.pattern.permute.xlu0 0
    %54 = vperm.xlu0 %53, %v36
    %v55 = vpop.permute.xlu0 %54
    %vm57 = vcmask 97280
    %v59 = vsel %vm57, %v27, 0
    %v62 = vsel %vm57, %v28, 0
    %v65 = vsel %vm57, %v29, 0
    %v68 = vsel %vm57, %v30, 0
    %vm70 = vcmask 1043456
    %v72 = vsel %vm70, %v32, 0
    %74 = vmatprep.subr.mxu0 0.0
    %75 = vmatpush1.msra.mxu0 0.0
    %76 = vmatprep.subr.mxu0 0.0
    %77 = vmatpush1.msra.mxu0 0.0
    %78 = vmatprep.subr.mxu0 0.0
    %79 = vmatpush1.msra.mxu0 0.0
    %80 = vmatprep.subr.mxu0 0.0
    %81 = vmatpush1.msra.mxu0 0.0
    %82 = vmatprep.subr.mxu0 0.0
    %83 = vmatpush1.msra.mxu0 0.0
    %84 = vmatprep.subr.mxu0 0.0
    %85 = vmatpush1.msra.mxu0 0.0
    %86 = vmatprep.subr.mxu0 0.0
    %87 = vmatpush1.msra.mxu0 0.0
    %88 = vmatprep.subr.mxu0 0.0
    %89 = vmatpush1.msra.mxu0 0.0
    %90 = vmatprep.subr.mxu0 0.0
    %91 = vmatpush1.msra.mxu0 0.0
    %92 = vmatprep.subr.mxu0 0.0
    %93 = vmatpush1.msra.mxu0 0.0
    %94 = vmatprep.subr.mxu0 0.0
    %95 = vmatpush1.msra.mxu0 0.0
    %96 = vmatprep.subr.mxu0 0.0
    %97 = vmatpush1.msra.mxu0 0.0
    %98 = vmatprep.subr.mxu0 0.0
    %99 = vmatpush1.msra.mxu0 0.0
    %100 = vmatprep.subr.mxu0 0.0
    %101 = vmatpush1.msra.mxu0 0.0
    %102 = vmatprep.subr.mxu0 0.0
    %103 = vmatpush1.msra.mxu0 %v72
    %104 = vmatprep.subr.mxu0 0.0
    %105 = vmatpush1.msra.mxu0 %v31
    %106 = vmatprep.subr.mxu0 0.0
    %107 = vmatpush2.msra.mxu0 0.0
    %108 = vmatprep.subr.mxu0 0.0
    %109 = vmatpush2.msra.mxu0 0.0
    %110 = vmatprep.subr.mxu0 0.0
    %111 = vmatpush2.msra.mxu0 0.0
    %112 = vmatprep.subr.mxu0 0.0
    %113 = vmatpush2.msra.mxu0 0.0
    %114 = vmatprep.subr.mxu0 0.0
    %115 = vmatpush2.msra.mxu0 0.0
    %116 = vmatprep.subr.mxu0 0.0
    %117 = vmatpush2.msra.mxu0 0.0
    %118 = vmatprep.subr.mxu0 0.0
    %119 = vmatpush2.msra.mxu0 0.0
    %120 = vmatprep.subr.mxu0 0.0
    %121 = vmatpush2.msra.mxu0 0.0
    %122 = vmatprep.subr.mxu0 0.0
    %123 = vmatpush2.msra.mxu0 0.0
    %124 = vmatprep.subr.mxu0 0.0
    %125 = vmatpush2.msra.mxu0 0.0
    %126 = vmatprep.subr.mxu0 0.0
    %127 = vmatpush2.msra.mxu0 0.0
    %128 = vmatprep.subr.mxu0 0.0
    %129 = vmatpush2.msra.mxu0 0.0
    %130 = vmatprep.subr.mxu0 0.0
    %131 = vmatpush2.msra.mxu0 0.0
    %132 = vmatprep.subr.mxu0 0.0
    %133 = vmatpush2.msra.mxu0 0.0
    %134 = vmatprep.subr.mxu0 0.0
    %135 = vmatpush2.msra.mxu0 0.0
    %136 = vmatprep.subr.mxu0 0.0
    %137 = vmatpush2.msra.mxu0 0.0
    %138 = vmatprep.mubr.f32.mxu0 0.0
    %139 = vmatmul.mubr.f32.gmra.mxu0 %v59
    %v140 = vpop.f32.mrf.mxu0
    %v141 = vadd.f32 %v40, %v140
    %v142 = vpop.f32.mrf.mxu0
    %143 = vmatprep.mubr.f32.mxu0 0.0
    %144 = vmatmul.mubr.f32.gmra.mxu0 %v62
    %v145 = vpop.f32.mrf.mxu0
    %v146 = vadd.f32 %v45, %v145
    %v147 = vpop.f32.mrf.mxu0
    %148 = vmatprep.mubr.f32.mxu0 0.0
    %149 = vmatmul.mubr.f32.gmra.mxu0 %v65
    %v150 = vpop.f32.mrf.mxu0
    %v151 = vadd.f32 %v50, %v150
    %v152 = vpop.f32.mrf.mxu0
    %153 = vmatprep.mubr.f32.mxu0 0.0
    %154 = vmatmul.mubr.f32.gmra.mxu0 %v68
    %v155 = vpop.f32.mrf.mxu0
    %v156 = vadd.f32 %v55, %v155
    %v157 = vpop.f32.mrf.mxu0
    %158 = vdwg.mxu0
    %v159 = vmax.f32 %v141, 0.0
    %v160 = vmax.f32 %v146, 0.0
    %v161 = vmax.f32 %v151, 0.0
    %v162 = vmax.f32 %v156, 0.0
    %v163 = vld [vmem:[%s3] sm:$0xff]
    %v164 = vld [vmem:[%s4] sm:$0xff]
    %v165 = vld [vmem:[%s5] sm:$0xff]
    %v166 = vld [vmem:[%s6] sm:$0xff]
    %168 = vset.pattern.permute.xlu0 0
    %169 = vperm.xlu0 %168, %v164
    %v170 = vpop.permute.xlu0 %169
    %vm172 = vcmask 261120
    %v174 = vsel %vm172, %v163, 0
    %176 = vmatprep.subr.mxu0 0.0
    %177 = vmatpush1.msra.mxu0 0.0
    %178 = vmatprep.subr.mxu0 0.0
    %179 = vmatpush1.msra.mxu0 0.0
    %180 = vmatprep.subr.mxu0 0.0
    %181 = vmatpush1.msra.mxu0 0.0
    %182 = vmatprep.subr.mxu0 0.0
    %183 = vmatpush1.msra.mxu0 0.0
    %184 = vmatprep.subr.mxu0 0.0
    %185 = vmatpush1.msra.mxu0 0.0
    %186 = vmatprep.subr.mxu0 0.0
    %187 = vmatpush1.msra.mxu0 0.0
    %188 = vmatprep.subr.mxu0 0.0
    %189 = vmatpush1.msra.mxu0 0.0
    %190 = vmatprep.subr.mxu0 0.0
    %191 = vmatpush1.msra.mxu0 0.0
    %192 = vmatprep.subr.mxu0 0.0
    %193 = vmatpush1.msra.mxu0 0.0
    %194 = vmatprep.subr.mxu0 0.0
    %195 = vmatpush1.msra.mxu0 0.0
    %196 = vmatprep.subr.mxu0 0.0
    %197 = vmatpush1.msra.mxu0 0.0
    %198 = vmatprep.subr.mxu0 0.0
    %199 = vmatpush1.msra.mxu0 0.0
    %200 = vmatprep.subr.mxu0 0.0
    %201 = vmatpush1.msra.mxu0 %v162
    %202 = vmatprep.subr.mxu0 0.0
    %203 = vmatpush1.msra.mxu0 %v161
    %204 = vmatprep.subr.mxu0 0.0
    %205 = vmatpush1.msra.mxu0 %v160
    %206 = vmatprep.subr.mxu0 0.0
    %207 = vmatpush1.msra.mxu0 %v159
    %208 = vmatprep.subr.mxu0 0.0
    %209 = vmatpush2.msra.mxu0 0.0
    %210 = vmatprep.subr.mxu0 0.0
    %211 = vmatpush2.msra.mxu0 0.0
    %212 = vmatprep.subr.mxu0 0.0
    %213 = vmatpush2.msra.mxu0 0.0
    %214 = vmatprep.subr.mxu0 0.0
    %215 = vmatpush2.msra.mxu0 0.0
    %216 = vmatprep.subr.mxu0 0.0
    %217 = vmatpush2.msra.mxu0 0.0
    %218 = vmatprep.subr.mxu0 0.0
    %219 = vmatpush2.msra.mxu0 0.0
    %220 = vmatprep.subr.mxu0 0.0
    %221 = vmatpush2.msra.mxu0 0.0
    %222 = vmatprep.subr.mxu0 0.0
    %223 = vmatpush2.msra.mxu0 0.0
    %224 = vmatprep.subr.mxu0 0.0
    %225 = vmatpush2.msra.mxu0 0.0
    %226 = vmatprep.subr.mxu0 0.0
    %227 = vmatpush2.msra.mxu0 0.0
    %228 = vmatprep.subr.mxu0 0.0
    %229 = vmatpush2.msra.mxu0 0.0
    %230 = vmatprep.subr.mxu0 0.0
    %231 = vmatpush2.msra.mxu0 0.0
    %232 = vmatprep.subr.mxu0 0.0
    %233 = vmatpush2.msra.mxu0 0.0
    %234 = vmatprep.subr.mxu0 0.0
    %235 = vmatpush2.msra.mxu0 0.0
    %236 = vmatprep.subr.mxu0 0.0
    %237 = vmatpush2.msra.mxu0 0.0
    %238 = vmatprep.subr.mxu0 0.0
    %239 = vmatpush2.msra.mxu0 0.0
    %240 = vmatprep.mubr.f32.mxu0 0.0
    %241 = vmatmul.mubr.f32.gmra.mxu0 %v174
    %v242 = vpop.f32.mrf.mxu0
    %v243 = vadd.f32 %v170, %v242
    %v244 = vpop.f32.mrf.mxu0
    %245 = vdwg.mxu0
    %v246 = vmax.f32 %v243, 0.0
    %248 = vset.pattern.permute.xlu0 0
    %249 = vperm.xlu0 %248, %v166
    %v250 = vpop.permute.xlu0 %249
    %vm252 = vcmask 64512
    %v254 = vsel %vm252, %v165, 0
    %256 = vmatprep.subr.mxu0 0.0
    %257 = vmatpush1.msra.mxu0 0.0
    %258 = vmatprep.subr.mxu0 0.0
    %259 = vmatpush1.msra.mxu0 0.0
    %260 = vmatprep.subr.mxu0 0.0
    %261 = vmatpush1.msra.mxu0 0.0
    %262 = vmatprep.subr.mxu0 0.0
    %263 = vmatpush1.msra.mxu0 0.0
    %264 = vmatprep.subr.mxu0 0.0
    %265 = vmatpush1.msra.mxu0 0.0
    %266 = vmatprep.subr.mxu0 0.0
    %267 = vmatpush1.msra.mxu0 0.0
    %268 = vmatprep.subr.mxu0 0.0
    %269 = vmatpush1.msra.mxu0 0.0
    %270 = vmatprep.subr.mxu0 0.0
    %271 = vmatpush1.msra.mxu0 0.0
    %272 = vmatprep.subr.mxu0 0.0
    %273 = vmatpush1.msra.mxu0 0.0
    %274 = vmatprep.subr.mxu0 0.0
    %275 = vmatpush1.msra.mxu0 0.0
    %276 = vmatprep.subr.mxu0 0.0
    %277 = vmatpush1.msra.mxu0 0.0
    %278 = vmatprep.subr.mxu0 0.0
    %279 = vmatpush1.msra.mxu0 0.0
    %280 = vmatprep.subr.mxu0 0.0
    %281 = vmatpush1.msra.mxu0 0.0
    %282 = vmatprep.subr.mxu0 0.0
    %283 = vmatpush1.msra.mxu0 0.0
    %284 = vmatprep.subr.mxu0 0.0
    %285 = vmatpush1.msra.mxu0 0.0
    %286 = vmatprep.subr.mxu0 0.0
    %287 = vmatpush1.msra.mxu0 %v246
    %288 = vmatprep.subr.mxu0 0.0
    %289 = vmatpush2.msra.mxu0 0.0
    %290 = vmatprep.subr.mxu0 0.0
    %291 = vmatpush2.msra.mxu0 0.0
    %292 = vmatprep.subr.mxu0 0.0
    %293 = vmatpush2.msra.mxu0 0.0
    %294 = vmatprep.subr.mxu0 0.0
    %295 = vmatpush2.msra.mxu0 0.0
    %296 = vmatprep.subr.mxu0 0.0
    %297 = vmatpush2.msra.mxu0 0.0
    %298 = vmatprep.subr.mxu0 0.0
    %299 = vmatpush2.msra.mxu0 0.0
    %300 = vmatprep.subr.mxu0 0.0
    %301 = vmatpush2.msra.mxu0 0.0
    %302 = vmatprep.subr.mxu0 0.0
    %303 = vmatpush2.msra.mxu0 0.0
    %304 = vmatprep.subr.mxu0 0.0
    %305 = vmatpush2.msra.mxu0 0.0
    %306 = vmatprep.subr.mxu0 0.0
    %307 = vmatpush2.msra.mxu0 0.0
    %308 = vmatprep.subr.mxu0 0.0
    %309 = vmatpush2.msra.mxu0 0.0
    %310 = vmatprep.subr.mxu0 0.0
    %311 = vmatpush2.msra.mxu0 0.0
    %312 = vmatprep.subr.mxu0 0.0
    %313 = vmatpush2.msra.mxu0 0.0
    %314 = vmatprep.subr.mxu0 0.0
    %315 = vmatpush2.msra.mxu0 0.0
    %316 = vmatprep.subr.mxu0 0.0
    %317 = vmatpush2.msra.mxu0 0.0
    %318 = vmatprep.subr.mxu0 0.0
    %319 = vmatpush2.msra.mxu0 0.0
    %320 = vmatprep.mubr.f32.mxu0 0.0
    %321 = vmatmul.mubr.f32.gmra.mxu0 %v254
    %v322 = vpop.f32.mrf.mxu0
    %v323 = vadd.f32 %v250, %v322
    %v324 = vpop.f32.mrf.mxu0
    %325 = vdwg.mxu0
    %326 = vst.msk [vmem:[#allocation2] sm:$0xff] %vm252, %v323
    // Predicated region
    $region30: #{tpu_custom_call.1} parent=1 // pred_check
      _
    $region31: #{tpu_custom_call.1} parent=1 // pred_check_branch
      %328 = sbr.rel (0) target = $region33
    $region32: #{tpu_custom_call.1} parent=1 // pred_region
      %s330 = ssub.s32 128, 128
      %331 = vsyncadd [#allocation3], %s330
      %s333 = sshll.u32 [#allocation2], 4
      %s334 = int_to_ptr.vmem [resolvable:$true] %s333
      %336 = dma.vmem_to_hbm [thread:$0]  %s334, 128, %s7, [#allocation3]
    $region33: #{tpu_custom_call.1} parent=1 // pred_fallthru
      _
    // Predicated region
    $region34: #{tpu_custom_call.1} parent=1 // pred_check
      _
    $region35: #{tpu_custom_call.1} parent=1 // pred_check_branch
      %338 = sbr.rel (0) target = $region37
    $region36: #{tpu_custom_call.1} parent=1 // pred_region
      %339 = dma.done [#allocation3], 128
    $region37: #{tpu_custom_call.1} parent=1 // pred_fallthru
      _
    %340 = vsyncpa [#allocation3], 1

</llo_original>
